<compile_context>
chip_gen: v7x
topology: tpu7x:2x2x1
jax: 0.10.0
libtpu: 0.0.40
codegen_flags: <defaults>
</compile_context>

<pallas_src>
import functools
import numpy as np
import jax
import jax.numpy as jnp
from jax.experimental import pallas as pl
from jax.experimental.pallas import tpu as pltpu


# --------------------------------------------------------------------------- #
# Streaming kernel: one pass over each (rows = B*C, spatial-tile) block.
#   out = x * c_in[row] + bias[row]
# --------------------------------------------------------------------------- #
def _kcfg_stream_kernel(x_ref, cin_ref, bias_ref, o_ref, *, half_round):
    x = x_ref[...]
    if half_round:
        # torch .half() rounds x before the denoiser sees it; emulate the rounding
        # in-register (bf16 is the TPU-native narrow float) instead of a separate
        # HBM cast pass in the wrapper.
        x = x.astype(jnp.bfloat16)
    xs = x.astype(jnp.float32)                       # (R, THW)
    # (R, 1) * (R, THW) + (R, 1): scalar-per-row FMA on the VPU, single pass.
    o_ref[...] = (xs * cin_ref[...] + bias_ref[...]).astype(o_ref.dtype)


def _pick_tile_hw(hw_padded, rows, bytes_per_elem_io, target_block_bytes):
    """Largest lane-dense spatial tile (multiple of 128) dividing hw_padded such
    that one in+out block stays under target_block_bytes."""
    bytes_per_col = max(rows * bytes_per_elem_io, 1)
    cap = max(128, (target_block_bytes // bytes_per_col) // 128 * 128)
    t = min(hw_padded, cap)
    t = max(128, (t // 128) * 128)
    while hw_padded % t != 0:
        t -= 128
    return t


# --------------------------------------------------------------------------- #
# Full KCFGDenoiser.forward equivalent.
# --------------------------------------------------------------------------- #
def kcfg_denoiser_forward(x, sigma, uncond, cond, cond_scale,
                          cond_arities, cond_weights, w_t, use_half=False):
    B, C, H, W = x.shape
    HW = H * W
    K = cond.shape[0]

    arities = np.asarray(cond_arities, dtype=np.int32)
    weights = np.asarray(list(cond_weights), dtype=np.float32)
    assert arities.shape[0] == B == sigma.shape[0] == uncond.shape[0]
    assert int(arities.sum()) == K, "sum(cond_arities) must equal cond.shape[0]"
    assert weights.shape[0] == K, "len(cond_weights) must equal cond.shape[0]"

    # Static (trace-time) mixing matrix:  M[b, j] = weight_j * cond_scale  iff
    # cond j belongs to batch item b;  ucoef[b] = 1 - rowsum(M)[b].
    group_ids = np.repeat(np.arange(B, dtype=np.int32), arities)
    m_np = np.zeros((B, K), dtype=np.float32)
    m_np[group_ids, np.arange(K)] = weights * float(cond_scale)
    u_coef_np = 1.0 - m_np.sum(axis=1)                                  # (B,)

    half = bool(use_half) and x.dtype in (jnp.float32, jnp.float64)
    # TODO(synk): torch .half() is fp16; bf16 is used as the TPU-native narrow float.
    out_dtype = jnp.bfloat16 if half else x.dtype

    # ---- conditioning-dependent bias (tiny, once per call; hoisted out of the
    # per-tile grid body).  feat(c) = tanh(mean_S(c) @ W^T)  ->  (B, C) bias ----
    wt_f32 = w_t.astype(jnp.float32)
    feat_u = jnp.tanh(jnp.mean(uncond.astype(jnp.float32), axis=1) @ wt_f32.T)   # (B, C)
    feat_c = jnp.tanh(jnp.mean(cond.astype(jnp.float32), axis=1) @ wt_f32.T)     # (K, C)
    bias = (feat_u * jnp.asarray(u_coef_np)[:, None]
            + jnp.asarray(m_np) @ feat_c)                                        # (B, C)

    c_in = 1.0 / jnp.sqrt(sigma.astype(jnp.float32) ** 2 + 1.0)                  # (B,)

    # ---- sublane-dense layout: rows = B*C (all 8 sublanes used even for C=4),
    # lanes = (padded) flattened spatial ----
    R = B * C
    bias_row = bias.reshape(R, 1)
    cin_row = jnp.broadcast_to(c_in[:, None], (B, C)).reshape(R, 1)

    x_r = x.reshape(R, HW)                     # keep native dtype: no wrapper cast
    HW_pad = max(128, -(-HW // 128) * 128)     # lane-dense insurance for any H, W
    if HW_pad != HW:
        x_r = jnp.pad(x_r, ((0, 0), (0, HW_pad - HW)))

    in_isz = jnp.dtype(x_r.dtype).itemsize
    out_isz = jnp.dtype(out_dtype).itemsize

    # Generation-aware tile target: ~8 MiB blocks on 128 MiB-VMEM parts (v5e/v6e),
    # ~4 MiB on 64 MiB parts (v7x).
    try:
        vmem_cap = pltpu.get_tpu_info().vmem_capacity_bytes
    except Exception:
        vmem_cap = 64 << 20
    target_block_bytes = (8 << 20) if vmem_cap >= (128 << 20) else (4 << 20)

    tile_hw = _pick_tile_hw(HW_pad, R, in_isz + out_isz, target_block_bytes)
    grid = (HW_pad // tile_hw,)

    # Explicit scoped-VMEM budget: double-buffered in+out blocks plus margin,
    # clamped below v7x's 64 MiB physical (and above v5e's 16 MiB default).
    per_step_bytes = R * tile_hw * (in_isz + out_isz) + 2 * R * 4
    vmem_limit = int(min(max(2 * per_step_bytes + (4 << 20), 16 << 20), 56 << 20))

    out = pl.pallas_call(
        functools.partial(_kcfg_stream_kernel, half_round=half),
        out_shape=jax.ShapeDtypeStruct((R, HW_pad), out_dtype),
        grid_spec=pl.GridSpec(
            grid=grid,
            in_specs=[
                pl.BlockSpec((R, tile_hw), lambda t: (0, t)),   # x (streamed)
                pl.BlockSpec((R, 1),       lambda t: (0, 0)),   # per-row c_in
                pl.BlockSpec((R, 1),       lambda t: (0, 0)),   # per-row CFG bias
            ],
            out_specs=pl.BlockSpec((R, tile_hw), lambda t: (0, t)),
        ),
        compiler_params=pltpu.CompilerParams(
            dimension_semantics=("parallel",),     # v7x: both TCs split spatial tiles
            vmem_limit_bytes=vmem_limit,
        ),
    )(x_r, cin_row, bias_row)

    if HW_pad != HW:
        out = out[:, :HW]
    return out.reshape(B, C, H, W)


# --------------------------------------------------------------------------- #
# Pure-JAX reference (same math as the PyTorch module, no Pallas)
# --------------------------------------------------------------------------- #
def reference_forward(x, sigma, uncond, cond, cond_scale, cond_arities, cond_weights, w_t):
    arities = np.asarray(cond_arities, dtype=np.int32)
    B = uncond.shape[0]
    K = cond.shape[0]
    cond_in = jnp.concatenate([uncond, cond], axis=0)
    x_in = jnp.concatenate([x, jnp.repeat(x, arities, axis=0)], axis=0)
    sigma_in = jnp.concatenate([sigma, jnp.repeat(sigma, arities, axis=0)], axis=0)

    c_in = 1.0 / jnp.sqrt(sigma_in ** 2 + 1.0)
    pooled = jnp.mean(cond_in, axis=1)                        # (B+K, E)
    feat = jnp.tanh(pooled @ w_t.T)                           # (B+K, C)
    out_all = x_in * c_in[:, None, None, None] + feat[:, :, None, None]

    uncond_out = out_all[:B]
    conds_out = out_all[B:]
    unconds = jnp.repeat(uncond_out, arities, axis=0)
    wts = (jnp.asarray(list(cond_weights), dtype=jnp.float32) * cond_scale
           ).reshape(K, 1, 1, 1)
    deltas = (conds_out - unconds) * wts
    group_ids = np.repeat(np.arange(B), arities)
    summed = jnp.zeros_like(uncond_out).at[group_ids].add(deltas)
    return uncond_out + summed


if __name__ == "__main__":
    key = jax.random.PRNGKey(0)
    B, C, H, W = 2, 4, 16, 16            # latents (NCHW, as in PyTorch)
    S, E = 8, 32                         # text-embedding seq / width
    cond_arities = (2, 1)                # 2 conds for sample 0, 1 for sample 1
    cond_weights = (0.6, 0.4, 1.0)
    cond_scale = 7.5
    K = int(sum(cond_arities))

    kx, ks, ku, kc, kw = jax.random.split(key, 5)
    x = jax.random.normal(kx, (B, C, H, W), dtype=jnp.float32)
    sigma = jax.random.uniform(ks, (B,), minval=0.5, maxval=3.0, dtype=jnp.float32)
    uncond = jax.random.normal(ku, (B, S, E), dtype=jnp.float32)
    cond = jax.random.normal(kc, (K, S, E), dtype=jnp.float32)
    # Deterministic synthetic inner-model weight (E -> C projection, stored transposed (C, E))
    w_t = jax.random.normal(kw, (C, E), dtype=jnp.float32) * 0.1

    # ---- f32 path ----
    out = kcfg_denoiser_forward(x, sigma, uncond, cond, cond_scale,
                                cond_arities, cond_weights, w_t, use_half=False)
    out = jax.block_until_ready(out)
    ref = reference_forward(x, sigma, uncond, cond, cond_scale,
                            cond_arities, cond_weights, w_t)
    np.testing.assert_allclose(np.asarray(out), np.asarray(ref), rtol=1e-4, atol=1e-4)

    # ---- bf16 (use_half) path: f32 streamed in, bf16 rounding in-kernel, bf16 out ----
    out_h = kcfg_denoiser_forward(x, sigma, uncond, cond, cond_scale,
                                  cond_arities, cond_weights, w_t, use_half=True)
    out_h = jax.block_until_ready(out_h)
    assert out_h.dtype == jnp.bfloat16
    x_rounded = x.astype(jnp.bfloat16).astype(jnp.float32)
    ref_h = reference_forward(x_rounded, sigma, uncond, cond, cond_scale,
                              cond_arities, cond_weights, w_t)
    np.testing.assert_allclose(np.asarray(out_h, dtype=np.float32), np.asarray(ref_h),
                               rtol=2e-2, atol=2e-2)

    print("KERNEL_OK")
</pallas_src>

<mosaic_0001>
module attributes {stable_mosaic.version = 11 : i64} {
  func.func @_kcfg_stream_kernel(%arg0: i32, %arg1: memref<8x256xf32, #tpu.memory_space<vmem>>, %arg2: memref<8x1xf32, #tpu.memory_space<vmem>>, %arg3: memref<8x1xf32, #tpu.memory_space<vmem>>, %arg4: memref<8x256xf32, #tpu.memory_space<vmem>>) attributes {dimension_semantics = [#tpu.dimension_semantics<parallel>], iteration_bounds = array<i64: 1>, scalar_prefetch = 0 : i64, scratch_operands = 0 : i64, tpu.core_type = #tpu.core_type<tc>, window_params = [{transform_indices = @transform_0, window_bounds = array<i64: 8, 256>}, {pipeline_mode = #tpu.pipeline_mode<synchronous>, transform_indices = @transform_1, window_bounds = array<i64: 8, 1>}, {pipeline_mode = #tpu.pipeline_mode<synchronous>, transform_indices = @transform_2, window_bounds = array<i64: 8, 1>}, {transform_indices = @transform_3, window_bounds = array<i64: 8, 256>}]} {
    %c0 = arith.constant 0 : index
    %c0_0 = arith.constant 0 : index
    %0 = vector.load %arg1[%c0, %c0_0] : memref<8x256xf32, #tpu.memory_space<vmem>>, vector<8x256xf32>
    %c0_1 = arith.constant 0 : index
    %c0_2 = arith.constant 0 : index
    %1 = vector.load %arg2[%c0_1, %c0_2] : memref<8x1xf32, #tpu.memory_space<vmem>>, vector<8x1xf32>
    %2 = vector.broadcast %1 : vector<8x1xf32> to vector<8x256xf32>
    %3 = arith.mulf %0, %2 : vector<8x256xf32>
    %c0_3 = arith.constant 0 : index
    %c0_4 = arith.constant 0 : index
    %4 = vector.load %arg3[%c0_3, %c0_4] : memref<8x1xf32, #tpu.memory_space<vmem>>, vector<8x1xf32>
    %5 = vector.broadcast %4 : vector<8x1xf32> to vector<8x256xf32>
    %6 = arith.addf %3, %5 : vector<8x256xf32>
    %c0_5 = arith.constant 0 : index
    %c0_6 = arith.constant 0 : index
    %7 = vector.load %arg4[%c0_5, %c0_6] : memref<8x256xf32, #tpu.memory_space<vmem>>, vector<8x256xf32>
    tpu.vector_store %arg4[%c0_5, %c0_6], %6 {strides = array<i32>} : memref<8x256xf32, #tpu.memory_space<vmem>>, vector<8x256xf32>,
    return
  }
  func.func @transform_0(%arg0: i32) -> (i32, i32) {
    %c0_i32 = arith.constant 0 : i32
    %c0_i32_0 = arith.constant 0 : i32
    return %c0_i32, %arg0 : i32, i32
  }
  func.func @transform_1(%arg0: i32) -> (i32, i32) {
    %c0_i32 = arith.constant 0 : i32
    %c0_i32_0 = arith.constant 0 : i32
    %c0_i32_1 = arith.constant 0 : i32
    return %c0_i32, %c0_i32_0 : i32, i32
  }
  func.func @transform_2(%arg0: i32) -> (i32, i32) {
    %c0_i32 = arith.constant 0 : i32
    %c0_i32_0 = arith.constant 0 : i32
    %c0_i32_1 = arith.constant 0 : i32
    return %c0_i32, %c0_i32_0 : i32, i32
  }
  func.func @transform_3(%arg0: i32) -> (i32, i32) {
    %c0_i32 = arith.constant 0 : i32
    %c0_i32_0 = arith.constant 0 : i32
    return %c0_i32, %arg0 : i32, i32
  }
}

</mosaic_0001>

<llo_original>
// kernel: tpu_custom_call.1
$region0: #{tpu_custom_call.1}
  #allocation0 [shape = 'u32[]', space=smem, size = 0x4, offset = 0x4, fixed_abs, tag = 'smem constant byte address 0x4 - core index']
  #allocation1 [shape = 'u32[144,128]{1,0:T(1,128)}', space=vmem, size = 0x12000, scoped, tag = 'internal scratch']
  %s0 = inlined_call_operand.vmem [shape: f32[8,256], index: 0, kind: input, shape index: {}]
  %s1 = inlined_call_operand.vmem [shape: f32[8,1], index: 1, kind: input, shape index: {}]
  %s2 = inlined_call_operand.vmem [shape: f32[8,1], index: 2, kind: input, shape index: {}]
  %s3 = inlined_call_operand.hbm [shape: f32[8,256], index: 3, kind: output, shape index: {}]
  %s4 = sld [smem:[#allocation0]]
  $region22: #{tpu_custom_call.1} parent=0
    _
  %s6 = ssub.s32 1, %s4
  %s7 = scalar_select 0, %s6, %s4
  $region1: #{tpu_custom_call.1} parent=0
    #allocation2 [shape = 'u8[8192]{0}', space=vmem, size = 0x2000, scoped, tag = 'output window, operand 0, single buffered']
    #allocation3 [shape = 's32[1]{0}', space=sflag, size = 0x4, scoped, tag = 'scoped memory for tpu_custom_call.1']
    %8 = vsyncpa [#allocation3], 0
    // Predicated region
    $region2: #{tpu_custom_call.1} parent=1 // pred_check
      _
    $region3: #{tpu_custom_call.1} parent=1 // pred_check_branch
      %10 = sbr.rel (0) target = $region5
    $region4: #{tpu_custom_call.1} parent=1 // pred_region
      _
    $region5: #{tpu_custom_call.1} parent=1 // pred_fallthru
      _
    // Predicated region
    $region6: #{tpu_custom_call.1} parent=1 // pred_check
      _
    $region7: #{tpu_custom_call.1} parent=1 // pred_check_branch
      %12 = sbr.rel (0) target = $region9
    $region8: #{tpu_custom_call.1} parent=1 // pred_region
      _
    $region9: #{tpu_custom_call.1} parent=1 // pred_fallthru
      _
    // Predicated region
    $region10: #{tpu_custom_call.1} parent=1 // pred_check
      _
    $region11: #{tpu_custom_call.1} parent=1 // pred_check_branch
      %14 = sbr.rel (0) target = $region13
    $region12: #{tpu_custom_call.1} parent=1 // pred_region
      _
    $region13: #{tpu_custom_call.1} parent=1 // pred_fallthru
      _
    %v15 = vld [vmem:[%s0] sm:$0xff]
    %v16 = vld [vmem:[%s0 + $0x8] sm:$0xff]
    %v17 = vld [vmem:[%s1] sm:$0xff]
    %19 = vset.pattern.permute.xlu0 0
    %20 = vperm.xlu0 %19, %v17
    %v21 = vpop.permute.xlu0 %20
    %v23 = vmul.f32 %v15, %v21
    %v24 = vmul.f32 %v16, %v21
    %v25 = vld [vmem:[%s2] sm:$0xff]
    %27 = vset.pattern.permute.xlu0 0
    %28 = vperm.xlu0 %27, %v25
    %v29 = vpop.permute.xlu0 %28
    %v31 = vadd.f32 %v23, %v29
    %v32 = vadd.f32 %v24, %v29
    %33 = vst [vmem:[#allocation2] sm:$0xff] %v31
    %34 = vst [vmem:[#allocation2 + $0x8] sm:$0xff] %v32
    // Predicated region
    $region14: #{tpu_custom_call.1} parent=1 // pred_check
      _
    $region15: #{tpu_custom_call.1} parent=1 // pred_check_branch
      %36 = sbr.rel (0) target = $region17
    $region16: #{tpu_custom_call.1} parent=1 // pred_region
      %s38 = ssub.s32 256, 256
      %39 = vsyncadd [#allocation3], %s38
      %s41 = sshll.u32 [#allocation2], 4
      %s42 = int_to_ptr.vmem [resolvable:$true] %s41
      %44 = dma.vmem_to_hbm [thread:$0]  %s42, 256, %s3, [#allocation3]
    $region17: #{tpu_custom_call.1} parent=1 // pred_fallthru
      _
    // Predicated region
    $region18: #{tpu_custom_call.1} parent=1 // pred_check
      _
    $region19: #{tpu_custom_call.1} parent=1 // pred_check_branch
      %46 = sbr.rel (0) target = $region21
    $region20: #{tpu_custom_call.1} parent=1 // pred_region
      %47 = dma.done [#allocation3], 256
    $region21: #{tpu_custom_call.1} parent=1 // pred_fallthru
      _
    %48 = vsyncpa [#allocation3], 1

</llo_original>
